<compile_context>
chip_gen: v7x
topology: tpu7x:2x2x1
jax: 0.10.0
libtpu: 0.0.40
codegen_flags: <defaults>
</compile_context>

<pallas_src>
import math
import functools

import jax
import jax.numpy as jnp
from jax import lax
from jax.experimental import pallas as pl
from jax.experimental.pallas import tpu as pltpu

_SUB = 8     # sublanes of the per-tile partial-sum output block
_LANE = 128  # lanes of the per-tile partial-sum output block


def _finalize_tile(tp, ps, ts, part_ref, *, tile, hw, beta2, eps):
    """tp/ps/ts: (N, 1, T) f32 class-reduced per-pixel sums -> write per-tile partial sums."""
    precision = tp / (ps + eps)
    recall = tp / (ts + eps)
    fscore = (precision * recall) / (precision * beta2 + recall + eps) * (1.0 + beta2)

    if hw % tile != 0:
        # Mask lanes of the padded last tile that fall outside the real H*W extent.
        pos = lax.broadcasted_iota(jnp.int32, precision.shape, 2) + pl.program_id(0) * tile
        valid = pos < hw
        fscore = jnp.where(valid, fscore, 0.0)
        precision = jnp.where(valid, precision, 0.0)
        recall = jnp.where(valid, recall, 0.0)

    fs_sum = jnp.sum(fscore)
    pr_sum = jnp.sum(precision)
    rc_sum = jnp.sum(recall)

    sub = lax.broadcasted_iota(jnp.int32, (_SUB, _LANE), 0)
    out_tile = jnp.where(sub == 0, fs_sum,
                jnp.where(sub == 1, pr_sum,
                 jnp.where(sub == 2, rc_sum, 0.0)))
    part_ref[...] = out_tile[None].astype(jnp.float32)


def _fscore_label_kernel(out_ref, lbl_ref, part_ref, *,
                         num_classes, threshold, beta2, eps, tile, hw):
    # out_ref: (N, C, T) native dtype logits; lbl_ref: (N, 1, T) int32 labels.
    y_pred = (out_ref[...].astype(jnp.float32) >= threshold).astype(jnp.float32)   # (N, C, T)
    lbl = lbl_ref[...]                                                              # (N, 1, T)
    c_iota = lax.broadcasted_iota(jnp.int32, y_pred.shape, 1)                       # (N, C, T)

    ps = jnp.sum(y_pred, axis=1, keepdims=True)                                     # (N, 1, T)
    tp = jnp.sum(jnp.where(c_iota == lbl, y_pred, 0.0), axis=1, keepdims=True)      # (N, 1, T)
    # Column sum of the (implicit) one-hot target: 1 for in-range labels, else 0.
    ts = jnp.logical_and(lbl >= 0, lbl < num_classes).astype(jnp.float32)           # (N, 1, T)

    _finalize_tile(tp, ps, ts, part_ref, tile=tile, hw=hw, beta2=beta2, eps=eps)


def _fscore_dense_kernel(out_ref, tgt_ref, part_ref, *, threshold, beta2, eps, tile, hw):
    # out_ref / tgt_ref: (N, C, T) native dtype.
    y_pred = (out_ref[...].astype(jnp.float32) >= threshold).astype(jnp.float32)
    y_true = tgt_ref[...].astype(jnp.float32)

    tp = jnp.sum(y_pred * y_true, axis=1, keepdims=True)
    ps = jnp.sum(y_pred, axis=1, keepdims=True)
    ts = jnp.sum(y_true, axis=1, keepdims=True)

    _finalize_tile(tp, ps, ts, part_ref, tile=tile, hw=hw, beta2=beta2, eps=eps)


def fscore_pallas(output, target, threshold=0.5, beta=1.0, eps=1e-9, tile_hw=1024):
    """Matches Fscore.forward: returns dict of scalar fscore / precision / recall."""
    beta2 = float(beta) ** 2
    N, C = int(output.shape[0]), int(output.shape[1])
    HW = int(math.prod(output.shape[2:])) if output.ndim > 2 else 1

    out3 = output.reshape(N, C, HW)  # free reshape, native dtype (no f32 upcast in HBM)

    label_path = (tuple(output.shape) != tuple(target.shape)
                  and jnp.issubdtype(target.dtype, jnp.integer))
    if label_path:
        second = target.reshape(N, 1, HW).astype(jnp.int32)
    else:
        if tuple(target.shape) != tuple(output.shape):
            raise ValueError("target must match output shape or be an integer label map")
        second = target.reshape(N, C, HW)

    # Lane tile: full extent if it already fits, else a multiple of 128.
    if HW <= tile_hw:
        T = HW
    else:
        T = max(_LANE, (int(tile_hw) // _LANE) * _LANE)
    G = pl.cdiv(HW, T)

    common = dict(threshold=float(threshold), beta2=beta2, eps=float(eps), tile=T, hw=HW)
    if label_path:
        kernel = functools.partial(_fscore_label_kernel, num_classes=C, **common)
        second_spec = pl.BlockSpec((N, 1, T), lambda j: (0, 0, j))
    else:
        kernel = functools.partial(_fscore_dense_kernel, **common)
        second_spec = pl.BlockSpec((N, C, T), lambda j: (0, 0, j))

    parts = pl.pallas_call(
        kernel,
        out_shape=jax.ShapeDtypeStruct((G, _SUB, _LANE), jnp.float32),
        grid=(G,),
        in_specs=[pl.BlockSpec((N, C, T), lambda j: (0, 0, j)), second_spec],
        out_specs=pl.BlockSpec((1, _SUB, _LANE), lambda j: (j, 0, 0)),
        compiler_params=pltpu.CompilerParams(
            dimension_semantics=("parallel",),
            vmem_limit_bytes=32 * 1024 * 1024,
        ),
    )(out3, second)

    inv_total = 1.0 / float(N * HW)
    return {
        "fscore": jnp.sum(parts[:, 0, 0]) * inv_total,
        "precision": jnp.sum(parts[:, 1, 0]) * inv_total,
        "recall": jnp.sum(parts[:, 2, 0]) * inv_total,
    }


def fscore_ref(output, target, threshold=0.5, beta=1.0, eps=1e-9):
    """Pure-JAX reference mirroring the PyTorch forward."""
    beta2 = float(beta) ** 2
    if tuple(output.shape) != tuple(target.shape) and jnp.issubdtype(target.dtype, jnp.integer):
        target = jax.nn.one_hot(target, output.shape[1], axis=1, dtype=jnp.float32)
    y_pred = (output.astype(jnp.float32) >= threshold).astype(jnp.float32)
    y_true = target.astype(jnp.float32)
    tp = jnp.sum(y_pred * y_true, axis=1)
    precision = tp / (jnp.sum(y_pred, axis=1) + eps)
    recall = tp / (jnp.sum(y_true, axis=1) + eps)
    fscore = (precision * recall) / (precision * beta2 + recall + eps) * (1.0 + beta2)
    return {
        "fscore": jnp.mean(fscore),
        "precision": jnp.mean(precision),
        "recall": jnp.mean(recall),
    }


if __name__ == "__main__":
    key = jax.random.PRNGKey(0)
    k1, k2, k3, k4, k5 = jax.random.split(key, 5)

    def check(res, ref, tag):
        for name in ("fscore", "precision", "recall"):
            a, b = float(res[name]), float(ref[name])
            assert abs(a - b) < 1e-5, (tag, name, a, b)

    # 1) Integer label targets (the to_onehot path in the PyTorch module), f32 NCHW logits.
    out1 = jax.random.uniform(k1, (2, 4, 16, 16), dtype=jnp.float32)
    lbl1 = jax.random.randint(k2, (2, 16, 16), 0, 4, dtype=jnp.int32)
    r1 = fscore_pallas(out1, lbl1)
    jax.block_until_ready(r1)
    check(r1, fscore_ref(out1, lbl1), "label_f32")

    # 2) Same-shape dense float target (no one-hot conversion in the module).
    out2 = jax.random.uniform(k3, (2, 4, 16, 16), dtype=jnp.float32)
    tgt2 = (jax.random.uniform(k4, (2, 4, 16, 16)) > 0.5).astype(jnp.float32)
    r2 = fscore_pallas(out2, tgt2)
    jax.block_until_ready(r2)
    check(r2, fscore_ref(out2, tgt2), "dense_f32")

    # 3) bf16 logits + label targets with H*W=1600 > tile=1024: multi-tile grid + masked
    #    partial last tile + native-dtype (no upcast) DMA path.
    out3 = jax.random.uniform(k5, (2, 3, 40, 40), dtype=jnp.float32).astype(jnp.bfloat16)
    lbl3 = jax.random.randint(k2, (2, 40, 40), 0, 3, dtype=jnp.int32)
    r3 = fscore_pallas(out3, lbl3, tile_hw=1024)
    jax.block_until_ready(r3)
    check(r3, fscore_ref(out3, lbl3), "label_bf16_masked")

    print("KERNEL_OK")
</pallas_src>

<mosaic_0001>
module attributes {stable_mosaic.version = 11 : i64} {
  func.func @_fscore_label_kernel(%arg0: i32, %arg1: memref<2x4x256xf32, #tpu.memory_space<vmem>>, %arg2: memref<2x1x256xi32, #tpu.memory_space<vmem>>, %arg3: memref<1x8x128xf32, #tpu.memory_space<vmem>>) attributes {dimension_semantics = [#tpu.dimension_semantics<parallel>], iteration_bounds = array<i64: 1>, scalar_prefetch = 0 : i64, scratch_operands = 0 : i64, tpu.core_type = #tpu.core_type<tc>, window_params = [{transform_indices = @transform_0, window_bounds = array<i64: 2, 4, 256>}, {transform_indices = @transform_1, window_bounds = array<i64: 2, 1, 256>}, {transform_indices = @transform_2, window_bounds = array<i64: 1, 8, 128>}]} {
    %c0 = arith.constant 0 : index
    %c0_0 = arith.constant 0 : index
    %c0_1 = arith.constant 0 : index
    %0 = vector.load %arg1[%c0, %c0_0, %c0_1] : memref<2x4x256xf32, #tpu.memory_space<vmem>>, vector<2x4x256xf32>
    %cst = arith.constant 5.000000e-01 : f32
    %1 = vector.broadcast %cst : f32 to vector<2x4x256xf32>
    %2 = arith.cmpf oge, %0, %1 : vector<2x4x256xf32>
    %3 = arith.extui %2 : vector<2x4x256xi1> to vector<2x4x256xi32>
    %4 = arith.sitofp %3 : vector<2x4x256xi32> to vector<2x4x256xf32>
    %c0_2 = arith.constant 0 : index
    %c0_3 = arith.constant 0 : index
    %c0_4 = arith.constant 0 : index
    %5 = vector.load %arg2[%c0_2, %c0_3, %c0_4] : memref<2x1x256xi32, #tpu.memory_space<vmem>>, vector<2x1x256xi32>
    %6 = tpu.iota {dimensions = array<i32: 1>} : vector<2x4x256xi32>
    %cst_5 = arith.constant dense<0.000000e+00> : vector<2x256xf32>
    %7 = vector.multi_reduction <add>, %4, %cst_5 [1] : vector<2x4x256xf32> to vector<2x256xf32>
    %8 = vector.shape_cast %7 : vector<2x256xf32> to vector<2x1x256xf32>
    %9 = vector.broadcast %5 : vector<2x1x256xi32> to vector<2x4x256xi32>
    %10 = arith.cmpi eq, %6, %9 : vector<2x4x256xi32>
    %cst_6 = arith.constant 0.000000e+00 : f32
    %11 = vector.broadcast %cst_6 : f32 to vector<2x4x256xf32>
    %12 = arith.select %10, %4, %11 : vector<2x4x256xi1>, vector<2x4x256xf32>
    %cst_7 = arith.constant dense<0.000000e+00> : vector<2x256xf32>
    %13 = vector.multi_reduction <add>, %12, %cst_7 [1] : vector<2x4x256xf32> to vector<2x256xf32>
    %14 = vector.shape_cast %13 : vector<2x256xf32> to vector<2x1x256xf32>
    %c0_i32 = arith.constant 0 : i32
    %15 = vector.broadcast %c0_i32 : i32 to vector<2x1x256xi32>
    %16 = arith.cmpi sge, %5, %15 : vector<2x1x256xi32>
    %c4_i32 = arith.constant 4 : i32
    %17 = vector.broadcast %c4_i32 : i32 to vector<2x1x256xi32>
    %18 = arith.cmpi slt, %5, %17 : vector<2x1x256xi32>
    %19 = arith.andi %16, %18 : vector<2x1x256xi1>
    %20 = arith.extui %19 : vector<2x1x256xi1> to vector<2x1x256xi32>
    %21 = arith.sitofp %20 : vector<2x1x256xi32> to vector<2x1x256xf32>
    %cst_8 = arith.constant 9.99999971E-10 : f32
    %22 = vector.broadcast %cst_8 : f32 to vector<2x1x256xf32>
    %23 = arith.addf %8, %22 : vector<2x1x256xf32>
    %24 = arith.divf %14, %23 : vector<2x1x256xf32>
    %cst_9 = arith.constant 9.99999971E-10 : f32
    %25 = vector.broadcast %cst_9 : f32 to vector<2x1x256xf32>
    %26 = arith.addf %21, %25 : vector<2x1x256xf32>
    %27 = arith.divf %14, %26 : vector<2x1x256xf32>
    %28 = arith.mulf %24, %27 : vector<2x1x256xf32>
    %cst_10 = arith.constant 1.000000e+00 : f32
    %29 = vector.broadcast %cst_10 : f32 to vector<2x1x256xf32>
    %30 = arith.mulf %24, %29 : vector<2x1x256xf32>
    %31 = arith.addf %30, %27 : vector<2x1x256xf32>
    %cst_11 = arith.constant 9.99999971E-10 : f32
    %32 = vector.broadcast %cst_11 : f32 to vector<2x1x256xf32>
    %33 = arith.addf %31, %32 : vector<2x1x256xf32>
    %34 = arith.divf %28, %33 : vector<2x1x256xf32>
    %cst_12 = arith.constant 2.000000e+00 : f32
    %35 = vector.broadcast %cst_12 : f32 to vector<2x1x256xf32>
    %36 = arith.mulf %34, %35 : vector<2x1x256xf32>
    %37 = vector.shape_cast %36 : vector<2x1x256xf32> to vector<1x2x1x256xf32>
    %cst_13 = arith.constant dense<0.000000e+00> : vector<1xf32>
    %38 = vector.multi_reduction <add>, %37, %cst_13 [1, 2, 3] : vector<1x2x1x256xf32> to vector<1xf32>
    %39 = vector.shape_cast %38 : vector<1xf32> to vector<1x1x1x1xf32>
    %40 = vector.extract %39[0, 0, 0, 0] : f32 from vector<1x1x1x1xf32>
    %41 = vector.shape_cast %24 : vector<2x1x256xf32> to vector<1x2x1x256xf32>
    %cst_14 = arith.constant dense<0.000000e+00> : vector<1xf32>
    %42 = vector.multi_reduction <add>, %41, %cst_14 [1, 2, 3] : vector<1x2x1x256xf32> to vector<1xf32>
    %43 = vector.shape_cast %42 : vector<1xf32> to vector<1x1x1x1xf32>
    %44 = vector.extract %43[0, 0, 0, 0] : f32 from vector<1x1x1x1xf32>
    %45 = vector.shape_cast %27 : vector<2x1x256xf32> to vector<1x2x1x256xf32>
    %cst_15 = arith.constant dense<0.000000e+00> : vector<1xf32>
    %46 = vector.multi_reduction <add>, %45, %cst_15 [1, 2, 3] : vector<1x2x1x256xf32> to vector<1xf32>
    %47 = vector.shape_cast %46 : vector<1xf32> to vector<1x1x1x1xf32>
    %48 = vector.extract %47[0, 0, 0, 0] : f32 from vector<1x1x1x1xf32>
    %49 = tpu.iota {dimensions = array<i32: 0>} : vector<8x128xi32>
    %c0_i32_16 = arith.constant 0 : i32
    %50 = vector.broadcast %c0_i32_16 : i32 to vector<8x128xi32>
    %51 = arith.cmpi eq, %49, %50 : vector<8x128xi32>
    %c1_i32 = arith.constant 1 : i32
    %52 = vector.broadcast %c1_i32 : i32 to vector<8x128xi32>
    %53 = arith.cmpi eq, %49, %52 : vector<8x128xi32>
    %c2_i32 = arith.constant 2 : i32
    %54 = vector.broadcast %c2_i32 : i32 to vector<8x128xi32>
    %55 = arith.cmpi eq, %49, %54 : vector<8x128xi32>
    %cst_17 = arith.constant 0.000000e+00 : f32
    %56 = vector.broadcast %48 : f32 to vector<8x128xf32>
    %57 = vector.broadcast %cst_17 : f32 to vector<8x128xf32>
    %58 = arith.select %55, %56, %57 : vector<8x128xi1>, vector<8x128xf32>
    %59 = vector.broadcast %44 : f32 to vector<8x128xf32>
    %60 = arith.select %53, %59, %58 : vector<8x128xi1>, vector<8x128xf32>
    %61 = vector.broadcast %40 : f32 to vector<8x128xf32>
    %62 = arith.select %51, %61, %60 : vector<8x128xi1>, vector<8x128xf32>
    %63 = vector.shape_cast %62 : vector<8x128xf32> to vector<1x8x128xf32>
    %c0_18 = arith.constant 0 : index
    %c0_19 = arith.constant 0 : index
    %c0_20 = arith.constant 0 : index
    %64 = vector.load %arg3[%c0_18, %c0_19, %c0_20] : memref<1x8x128xf32, #tpu.memory_space<vmem>>, vector<1x8x128xf32>
    tpu.vector_store %arg3[%c0_18, %c0_19, %c0_20], %63 {strides = array<i32>} : memref<1x8x128xf32, #tpu.memory_space<vmem>>, vector<1x8x128xf32>,
    return
  }
  func.func @transform_0(%arg0: i32) -> (i32, i32, i32) {
    %c0_i32 = arith.constant 0 : i32
    %c0_i32_0 = arith.constant 0 : i32
    %c0_i32_1 = arith.constant 0 : i32
    return %c0_i32, %c0_i32_0, %arg0 : i32, i32, i32
  }
  func.func @transform_1(%arg0: i32) -> (i32, i32, i32) {
    %c0_i32 = arith.constant 0 : i32
    %c0_i32_0 = arith.constant 0 : i32
    %c0_i32_1 = arith.constant 0 : i32
    return %c0_i32, %c0_i32_0, %arg0 : i32, i32, i32
  }
  func.func @transform_2(%arg0: i32) -> (i32, i32, i32) {
    %c0_i32 = arith.constant 0 : i32
    %c0_i32_0 = arith.constant 0 : i32
    %c0_i32_1 = arith.constant 0 : i32
    return %arg0, %c0_i32, %c0_i32_0 : i32, i32, i32
  }
}

</mosaic_0001>

<llo_original>
// kernel: tpu_custom_call.1
$region0: #{tpu_custom_call.1}
  #allocation0 [shape = 'u32[]', space=smem, size = 0x4, offset = 0x4, fixed_abs, tag = 'smem constant byte address 0x4 - core index']
  #allocation1 [shape = 'u32[144,128]{1,0:T(1,128)}', space=vmem, size = 0x12000, scoped, tag = 'internal scratch']
  %s0 = inlined_call_operand.hbm [shape: f32[2,4,256], index: 0, kind: input, shape index: {}]
  %s1 = inlined_call_operand.hbm [shape: s32[2,1,256], index: 1, kind: input, shape index: {}]
  %s2 = inlined_call_operand.hbm [shape: f32[1,8,128], index: 2, kind: output, shape index: {}]
  %s3 = sld [smem:[#allocation0]]
  $region26: #{tpu_custom_call.1} parent=0
    _
  %s5 = ssub.s32 1, %s3
  %s6 = scalar_select 0, %s5, %s3
  $region1: #{tpu_custom_call.1} parent=0
    #allocation2 [shape = 'u8[8192]{0}', space=vmem, size = 0x2000, scoped, tag = 'input window, operand 0, single buffered']
    #allocation3 [shape = 's32[1]{0}', space=sflag, size = 0x4, scoped, tag = 'scoped memory for tpu_custom_call.1']
    #allocation4 [shape = 's32[1]{0}', space=sflag, size = 0x4, scoped, tag = 'scoped memory for tpu_custom_call.1']
    #allocation5 [shape = 'u8[2048]{0}', space=vmem, size = 0x800, scoped, tag = 'input window, operand 1, single buffered']
    #allocation6 [shape = 's32[1]{0}', space=sflag, size = 0x4, scoped, tag = 'scoped memory for tpu_custom_call.1']
    #allocation7 [shape = 'u8[4096]{0}', space=vmem, size = 0x1000, scoped, tag = 'output window, operand 0, single buffered']
    %7 = vsyncpa [#allocation3], 0
    %8 = vsyncpa [#allocation6], 0
    %9 = vsyncpa [#allocation4], 0
    // Predicated region
    $region2: #{tpu_custom_call.1} parent=1 // pred_check
      _
    $region3: #{tpu_custom_call.1} parent=1 // pred_check_branch
      %11 = sbr.rel (0) target = $region5
    $region4: #{tpu_custom_call.1} parent=1 // pred_region
      %s13 = ssub.s32 256, 256
      %14 = vsyncadd [#allocation3], %s13
      %s15 = sshll.u32 [#allocation2], 4
      %s16 = int_to_ptr.vmem [resolvable:$true] %s15
      %21 = dma.hbm_to_vmem [thread:$0]  %s0, 256, %s16, [#allocation3], 128, 128, 8
    $region5: #{tpu_custom_call.1} parent=1 // pred_fallthru
      _
    // Predicated region
    $region6: #{tpu_custom_call.1} parent=1 // pred_check
      _
    $region7: #{tpu_custom_call.1} parent=1 // pred_check_branch
      %23 = sbr.rel (0) target = $region9
    $region8: #{tpu_custom_call.1} parent=1 // pred_region
      %s25 = ssub.s32 64, 64
      %26 = vsyncadd [#allocation6], %s25
      %s27 = sshll.u32 [#allocation5], 4
      %s28 = int_to_ptr.vmem [resolvable:$true] %s27
      %33 = dma.hbm_to_vmem [thread:$0]  %s1, 64, %s28, [#allocation6], 32, 32, 2
    $region9: #{tpu_custom_call.1} parent=1 // pred_fallthru
      _
    // Predicated region
    $region10: #{tpu_custom_call.1} parent=1 // pred_check
      _
    $region11: #{tpu_custom_call.1} parent=1 // pred_check_branch
      %35 = sbr.rel (0) target = $region13
    $region12: #{tpu_custom_call.1} parent=1 // pred_region
      %36 = dma.done [#allocation3], 256
    $region13: #{tpu_custom_call.1} parent=1 // pred_fallthru
      _
    // Predicated region
    $region14: #{tpu_custom_call.1} parent=1 // pred_check
      _
    $region15: #{tpu_custom_call.1} parent=1 // pred_check_branch
      %38 = sbr.rel (0) target = $region17
    $region16: #{tpu_custom_call.1} parent=1 // pred_region
      %39 = dma.done [#allocation6], 64
    $region17: #{tpu_custom_call.1} parent=1 // pred_fallthru
      _
    %v40 = vld [vmem:[#allocation2] sm:$0xff]
    %v41 = vld [vmem:[#allocation2 + $0x8] sm:$0xff]
    %vm42 = vcmp.ge.f32.partialorder %v40, 0.5
    %vm43 = vcmp.ge.f32.partialorder %v41, 0.5
    %v44 = vsel %vm42, 1, 0
    %v45 = vsel %vm43, 1, 0
    %v46 = vcvt.s32.f32 %v44
    %v47 = vcvt.s32.f32 %v45
    %v48 = vld [vmem:[#allocation5] sm:$0x3]
    %v49 = vld [vmem:[#allocation5 + $0x2] sm:$0x3]
    %v50 = vlaneseq
    %v51 = vshrl.u32 %v50, 7
    %v54 = vcombine.high %v46, %v46
    %v55 = vcombine.high %v47, %v47
    %vm58 = vcmask 1043456
    %v59 = vsel %vm58, %v46, 0.0
    %v60 = vrot.slane %v59, 4
    %v61 = vadd.f32 %v59, %v60
    %v62 = vrot.slane %v61, 2
    %v63 = vadd.f32 %v61, %v62
    %v64 = vrot.slane %v63, 1
    %v65 = vadd.f32 %v63, %v64
    %v66 = vsel %vm58, %v54, 0.0
    %v67 = vrot.slane %v66, 4
    %v68 = vadd.f32 %v66, %v67
    %v69 = vrot.slane %v68, 2
    %v70 = vadd.f32 %v68, %v69
    %v71 = vrot.slane %v70, 1
    %v72 = vadd.f32 %v70, %v71
    %v73 = vsel %vm58, %v47, 0.0
    %v74 = vrot.slane %v73, 4
    %v75 = vadd.f32 %v73, %v74
    %v76 = vrot.slane %v75, 2
    %v77 = vadd.f32 %v75, %v76
    %v78 = vrot.slane %v77, 1
    %v79 = vadd.f32 %v77, %v78
    %v80 = vsel %vm58, %v55, 0.0
    %v81 = vrot.slane %v80, 4
    %v82 = vadd.f32 %v80, %v81
    %v83 = vrot.slane %v82, 2
    %v84 = vadd.f32 %v82, %v83
    %v85 = vrot.slane %v84, 1
    %v86 = vadd.f32 %v84, %v85
    %v87 = vlaneseq
    %v88 = vshrl.u32 %v87, 7
    %v89 = vsub.s32 0, %v88
    %v90 = vrot.slane %v48, %v89
    %v91 = vlaneseq
    %v92 = vshrl.u32 %v91, 7
    %v93 = vsub.s32 1, %v92
    %v94 = vrot.slane %v48, %v93
    %v95 = vlaneseq
    %v96 = vshrl.u32 %v95, 7
    %v97 = vsub.s32 0, %v96
    %v98 = vrot.slane %v49, %v97
    %v99 = vlaneseq
    %v100 = vshrl.u32 %v99, 7
    %v101 = vsub.s32 1, %v100
    %v102 = vrot.slane %v49, %v101
    %vm103 = vcmp.eq.s32.totalorder %v51, %v90
    %vm104 = vcmp.eq.s32.totalorder %v51, %v94
    %vm105 = vcmp.eq.s32.totalorder %v51, %v98
    %vm106 = vcmp.eq.s32.totalorder %v51, %v102
    %v107 = vsel %vm103, %v46, 0.0
    %v108 = vsel %vm104, %v54, 0.0
    %v109 = vsel %vm105, %v47, 0.0
    %v110 = vsel %vm106, %v55, 0.0
    %v111 = vsel %vm58, %v107, 0.0
    %v112 = vrot.slane %v111, 4
    %v113 = vadd.f32 %v111, %v112
    %v114 = vrot.slane %v113, 2
    %v115 = vadd.f32 %v113, %v114
    %v116 = vrot.slane %v115, 1
    %v117 = vadd.f32 %v115, %v116
    %v118 = vsel %vm58, %v108, 0.0
    %v119 = vrot.slane %v118, 4
    %v120 = vadd.f32 %v118, %v119
    %v121 = vrot.slane %v120, 2
    %v122 = vadd.f32 %v120, %v121
    %v123 = vrot.slane %v122, 1
    %v124 = vadd.f32 %v122, %v123
    %v125 = vsel %vm58, %v109, 0.0
    %v126 = vrot.slane %v125, 4
    %v127 = vadd.f32 %v125, %v126
    %v128 = vrot.slane %v127, 2
    %v129 = vadd.f32 %v127, %v128
    %v130 = vrot.slane %v129, 1
    %v131 = vadd.f32 %v129, %v130
    %v132 = vsel %vm58, %v110, 0.0
    %v133 = vrot.slane %v132, 4
    %v134 = vadd.f32 %v132, %v133
    %v135 = vrot.slane %v134, 2
    %v136 = vadd.f32 %v134, %v135
    %v137 = vrot.slane %v136, 1
    %v138 = vadd.f32 %v136, %v137
    %vm139 = vcmp.ge.s32.totalorder %v48, 0
    %vm140 = vcmp.ge.s32.totalorder %v49, 0
    %vm141 = vcmp.lt.s32.totalorder %v48, 4
    %vm142 = vcmp.lt.s32.totalorder %v49, 4
    %vm143 = vmand %vm139, %vm141
    %vm144 = vmand %vm140, %vm142
    %v145 = vsel %vm143, 1, 0
    %v146 = vsel %vm144, 1, 0
    %v147 = vcvt.s32.f32 %v145
    %v148 = vcvt.s32.f32 %v146
    %v149 = vadd.f32 %v65, 1e-09
    %v150 = vadd.f32 %v72, 1e-09
    %v151 = vadd.f32 %v79, 1e-09
    %v152 = vadd.f32 %v86, 1e-09
    %v153 = vrcp.pop %v149
    %v154 = vmul.f32 %v117, %v153
    %v155 = vrcp.pop %v150
    %v156 = vmul.f32 %v124, %v155
    %v157 = vrcp.pop %v151
    %v158 = vmul.f32 %v131, %v157
    %v159 = vrcp.pop %v152
    %v160 = vmul.f32 %v138, %v159
    %v161 = vadd.f32 %v147, 1e-09
    %v162 = vadd.f32 %v148, 1e-09
    %v165 = vlaneseq
    %v166 = vshrl.u32 %v165, 7
    %v167 = vsub.s32 0, %v166
    %v168 = vrot.slane %v161, %v167
    %v169 = vlaneseq
    %v170 = vshrl.u32 %v169, 7
    %v171 = vsub.s32 1, %v170
    %v172 = vrot.slane %v161, %v171
    %v173 = vlaneseq
    %v174 = vshrl.u32 %v173, 7
    %v175 = vsub.s32 0, %v174
    %v176 = vrot.slane %v162, %v175
    %v177 = vlaneseq
    %v178 = vshrl.u32 %v177, 7
    %v179 = vsub.s32 1, %v178
    %v180 = vrot.slane %v162, %v179
    %v185 = vrcp.pop %v168
    %v186 = vmul.f32 %v117, %v185
    %v187 = vrcp.pop %v172
    %v188 = vmul.f32 %v124, %v187
    %v189 = vrcp.pop %v176
    %v190 = vmul.f32 %v131, %v189
    %v191 = vrcp.pop %v180
    %v192 = vmul.f32 %v138, %v191
    %v193 = vmul.f32 %v154, %v186
    %v194 = vmul.f32 %v156, %v188
    %v195 = vmul.f32 %v158, %v190
    %v196 = vmul.f32 %v160, %v192
    %v197 = vadd.f32 %v154, %v186
    %v198 = vadd.f32 %v156, %v188
    %v199 = vadd.f32 %v158, %v190
    %v200 = vadd.f32 %v160, %v192
    %v201 = vadd.f32 %v197, 1e-09
    %v202 = vadd.f32 %v198, 1e-09
    %v203 = vadd.f32 %v199, 1e-09
    %v204 = vadd.f32 %v200, 1e-09
    %v205 = vrcp.pop %v201
    %v206 = vmul.f32 %v193, %v205
    %v207 = vrcp.pop %v202
    %v208 = vmul.f32 %v194, %v207
    %v209 = vrcp.pop %v203
    %v210 = vmul.f32 %v195, %v209
    %v211 = vrcp.pop %v204
    %v212 = vmul.f32 %v196, %v211
    %v213 = vmul.f32 %v206, 2.0
    %v214 = vmul.f32 %v208, 2.0
    %v215 = vmul.f32 %v210, 2.0
    %v216 = vmul.f32 %v212, 2.0
    %vm217 = vcmask 1040384
    %v218 = vsel %vm217, %v213, 0.0
    %v219 = vsel %vm217, %v214, 0.0
    %v220 = vadd.f32 %v218, %v219
    %v221 = vsel %vm217, %v215, 0.0
    %v222 = vadd.f32 %v220, %v221
    %v223 = vsel %vm217, %v216, 0.0
    %v224 = vadd.f32 %v222, %v223
    %225 = vadd.xlane.f32.xlu0 %v224
    %v226 = vpop.xlane.xlu0 %225
    %v227 = vrot.slane %v226, 4
    %v228 = vadd.f32 %v226, %v227
    %v229 = vrot.slane %v228, 2
    %v230 = vadd.f32 %v228, %v229
    %v231 = vrot.slane %v230, 1
    %v232 = vadd.f32 %v230, %v231
    %s233 = vtos %v232
    %v234 = vsel %vm217, %v154, 0.0
    %v235 = vsel %vm217, %v156, 0.0
    %v236 = vadd.f32 %v234, %v235
    %v237 = vsel %vm217, %v158, 0.0
    %v238 = vadd.f32 %v236, %v237
    %v239 = vsel %vm217, %v160, 0.0
    %v240 = vadd.f32 %v238, %v239
    %241 = vadd.xlane.f32.xlu0 %v240
    %v242 = vpop.xlane.xlu0 %241
    %v243 = vrot.slane %v242, 4
    %v244 = vadd.f32 %v242, %v243
    %v245 = vrot.slane %v244, 2
    %v246 = vadd.f32 %v244, %v245
    %v247 = vrot.slane %v246, 1
    %v248 = vadd.f32 %v246, %v247
    %s249 = vtos %v248
    %v250 = vsel %vm217, %v186, 0.0
    %v251 = vsel %vm217, %v188, 0.0
    %v252 = vadd.f32 %v250, %v251
    %v253 = vsel %vm217, %v190, 0.0
    %v254 = vadd.f32 %v252, %v253
    %v255 = vsel %vm217, %v192, 0.0
    %v256 = vadd.f32 %v254, %v255
    %257 = vadd.xlane.f32.xlu0 %v256
    %v258 = vpop.xlane.xlu0 %257
    %v259 = vrot.slane %v258, 4
    %v260 = vadd.f32 %v258, %v259
    %v261 = vrot.slane %v260, 2
    %v262 = vadd.f32 %v260, %v261
    %v263 = vrot.slane %v262, 1
    %v264 = vadd.f32 %v262, %v263
    %s265 = vtos %v264
    %vm266 = vcmp.eq.s32.totalorder %v51, 0
    %vm267 = vcmp.eq.s32.totalorder %v51, 1
    %vm268 = vcmp.eq.s32.totalorder %v51, 2
    %v269 = vstv %s265
    %v270 = vsel %vm268, %v269, 0.0
    %v271 = vstv %s249
    %v272 = vsel %vm267, %v271, %v270
    %v273 = vstv %s233
    %v274 = vsel %vm266, %v273, %v272
    %275 = vst [vmem:[#allocation7] sm:$0xff] %v274
    // Predicated region
    $region18: #{tpu_custom_call.1} parent=1 // pred_check
      _
    $region19: #{tpu_custom_call.1} parent=1 // pred_check_branch
      %277 = sbr.rel (0) target = $region21
    $region20: #{tpu_custom_call.1} parent=1 // pred_region
      %s279 = ssub.s32 128, 128
      %280 = vsyncadd [#allocation4], %s279
      %s282 = sshll.u32 [#allocation7], 4
      %s283 = int_to_ptr.vmem [resolvable:$true] %s282
      %285 = dma.vmem_to_hbm [thread:$0]  %s283, 128, %s2, [#allocation4]
    $region21: #{tpu_custom_call.1} parent=1 // pred_fallthru
      _
    // Predicated region
    $region22: #{tpu_custom_call.1} parent=1 // pred_check
      _
    $region23: #{tpu_custom_call.1} parent=1 // pred_check_branch
      %287 = sbr.rel (0) target = $region25
    $region24: #{tpu_custom_call.1} parent=1 // pred_region
      %288 = dma.done [#allocation4], 128
    $region25: #{tpu_custom_call.1} parent=1 // pred_fallthru
      _
    %289 = vsyncpa [#allocation3], 1
    %290 = vsyncpa [#allocation6], 1
    %291 = vsyncpa [#allocation4], 1

</llo_original>
